<compile_context>
chip_gen: v7x
topology: tpu7x:2x2x1
jax: 0.10.0
libtpu: 0.0.40
codegen_flags: <defaults>
</compile_context>

<pallas_src>
import functools
import math

import numpy as np
import jax
import jax.numpy as jnp
from jax.experimental import pallas as pl
from jax.experimental.pallas import tpu as pltpu

_BN_EPS = 1e-5


# ----------------------------------------------------------------------------
# kernel: one fused (BN-folded) conv tile = matmul + bias
# ----------------------------------------------------------------------------
def _conv_bn_matmul_kernel(a_ref, w_ref, b_ref, o_ref):
    """Refs:
         a_ref : (1, K, tm)     im2col tile (K = kh*kw*Cin in sublanes,
                                tm flattened output pixels in lanes)
         w_ref : (Cout, K)      BN-folded weights (resident across the grid)
         b_ref : (Cout, 1)      BN-folded bias
         o_ref : (1, Cout, tm)  output tile, NCHW-flat, lane-dense store
    """
    acc = jnp.dot(w_ref[...], a_ref[0], preferred_element_type=jnp.float32)
    o_ref[0] = (acc + b_ref[...]).astype(o_ref.dtype)


# ----------------------------------------------------------------------------
# wrapper
# ----------------------------------------------------------------------------
def _pick_tile_m(m, k, cout, target):
    """Flattened-output-pixel tile size: multiple of 128, VMEM-bounded."""
    if m <= 128:
        return m                                   # tiny image: one (narrow) tile
    k_pad = ((k + 7) // 8) * 8
    cout_pad = ((cout + 7) // 8) * 8
    per_col = (k_pad + cout_pad) * 4 * 2           # double-buffered A + out, bytes/lane-col
    budget = 12 * 1024 * 1024                      # headroom under v7x 32 MiB scoped VMEM
    cap = max(128, (budget // per_col) // 128 * 128)
    tm = min(max(128, target // 128 * 128), cap)
    tm = min(tm, ((m + 127) // 128) * 128)
    return tm


def downsample_forward(params, x_nchw, *, stride, tile_m=2048):
    """DownSampling.forward: Conv2d(k, stride, padding=k//2) + BatchNorm2d (eval)."""
    w = params["conv"]["w"]                        # (Cout, Cin, KH, KW)  PyTorch layout
    b = params["conv"]["b"]                        # (Cout,)
    bn = params["bn"]

    cout, cin, kh, kw = w.shape
    sh, sw = (stride, stride) if isinstance(stride, int) else tuple(stride)
    ph, pw = kh // 2, kw // 2

    n, _, h, wd = x_nchw.shape
    ho = (h + 2 * ph - kh) // sh + 1
    wo = (wd + 2 * pw - kw) // sw + 1
    K = kh * kw * cin
    m = ho * wo

    # ---- fold BatchNorm (eval / running stats) into conv weight & bias (f32) ----
    gamma = bn["gamma"].astype(jnp.float32)
    beta = bn["beta"].astype(jnp.float32)
    mean = bn["mean"].astype(jnp.float32)
    var = bn["var"].astype(jnp.float32)
    inv = gamma * jax.lax.rsqrt(var + _BN_EPS)                        # (Cout,)
    w_f = w.astype(jnp.float32) * inv[:, None, None, None]           # (Cout,Cin,KH,KW)
    w_f = jnp.transpose(w_f, (0, 2, 3, 1)).reshape(cout, K)          # k = (i*kw+j)*Cin+c
    w_f = w_f.astype(x_nchw.dtype)
    b_f = ((b.astype(jnp.float32) - mean) * inv + beta).reshape(cout, 1)

    # ---- spatial tiling over flattened output pixels ----
    tm = _pick_tile_m(m, K, cout, tile_m)
    n_t = pl.cdiv(m, tm)
    if n * n_t < 2 and m > 128:                    # keep both v7x TensorCores busy
        tm = ((pl.cdiv(m, 2) + 127) // 128) * 128
        n_t = pl.cdiv(m, tm)
    m_pad = n_t * tm

    # ---- one wrapper rearrangement pass: pad + im2col in "CKM" layout ----
    xp = jnp.pad(x_nchw, ((0, 0), (0, 0), (ph, ph), (pw, pw)))
    taps = []
    for i in range(kh):
        for j in range(kw):
            taps.append(xp[:, :, i:i + sh * (ho - 1) + 1:sh,
                               j:j + sw * (wo - 1) + 1:sw])           # (N,Cin,Ho,Wo)
    a = jnp.stack(taps, axis=1).reshape(n, K, m)                      # (N, K, Ho*Wo)
    if m_pad > m:                                   # keep activation block reads in-bounds
        a = jnp.pad(a, ((0, 0), (0, 0), (0, m_pad - m)))

    out = pl.pallas_call(
        _conv_bn_matmul_kernel,
        out_shape=jax.ShapeDtypeStruct((n, cout, m), x_nchw.dtype),
        grid=(n, n_t),
        in_specs=[
            pl.BlockSpec((1, K, tm), lambda bi, ti: (bi, 0, ti)),      # activation tile
            pl.BlockSpec((cout, K), lambda bi, ti: (0, 0)),            # resident weights
            pl.BlockSpec((cout, 1), lambda bi, ti: (0, 0)),            # resident bias
        ],
        out_specs=pl.BlockSpec((1, cout, tm), lambda bi, ti: (bi, 0, ti)),
        compiler_params=pltpu.CompilerParams(
            dimension_semantics=("parallel", "parallel")),
    )(a, w_f, b_f)

    return out.reshape(n, cout, ho, wo)             # already NCHW; view-only reshape


# ----------------------------------------------------------------------------
# float64 numpy reference (exact semantics of the PyTorch module, eval mode)
# ----------------------------------------------------------------------------
def downsample_reference(params, x_nchw, *, stride):
    w = np.asarray(params["conv"]["w"], np.float64)
    b = np.asarray(params["conv"]["b"], np.float64)
    g = np.asarray(params["bn"]["gamma"], np.float64)
    be = np.asarray(params["bn"]["beta"], np.float64)
    mu = np.asarray(params["bn"]["mean"], np.float64)
    va = np.asarray(params["bn"]["var"], np.float64)
    x = np.asarray(x_nchw, np.float64)

    cout, cin, kh, kw = w.shape
    sh, sw = (stride, stride) if isinstance(stride, int) else tuple(stride)
    ph, pw = kh // 2, kw // 2
    n, _, h, wd = x.shape
    ho = (h + 2 * ph - kh) // sh + 1
    wo = (wd + 2 * pw - kw) // sw + 1

    xp = np.pad(x, ((0, 0), (0, 0), (ph, ph), (pw, pw)))
    y = np.zeros((n, cout, ho, wo), np.float64)
    for i in range(kh):
        for j in range(kw):
            patch = xp[:, :, i:i + sh * (ho - 1) + 1:sh, j:j + sw * (wo - 1) + 1:sw]
            y += np.einsum("nchw,oc->nohw", patch, w[:, :, i, j])
    y += b[None, :, None, None]
    inv = g / np.sqrt(va + _BN_EPS)
    return (y - mu[None, :, None, None]) * inv[None, :, None, None] + \
        be[None, :, None, None]


# ----------------------------------------------------------------------------
if __name__ == "__main__":
    key = jax.random.PRNGKey(0)
    keys = iter(jax.random.split(key, 48))

    def init_downsample(cin, cout, kh, kw):
        fan = cin * kh * kw
        bound = 1.0 / math.sqrt(fan)
        return {
            "conv": {"w": jax.random.uniform(next(keys), (cout, cin, kh, kw),
                                             jnp.float32, -bound, bound),
                     "b": jax.random.uniform(next(keys), (cout,), jnp.float32,
                                             -bound, bound)},
            "bn": {"gamma": jax.random.uniform(next(keys), (cout,), jnp.float32, 0.5, 1.5),
                   "beta": 0.1 * jax.random.normal(next(keys), (cout,), jnp.float32),
                   "mean": 0.1 * jax.random.normal(next(keys), (cout,), jnp.float32),
                   "var": jax.random.uniform(next(keys), (cout,), jnp.float32, 0.5, 1.5)},
        }

    # ---- config 1: DownSampling(4 -> 32, kernel (3,3), stride 2), x (2,4,16,16)
    #      (single small tile per image; narrow masked store is unavoidable at M=64)
    p1 = init_downsample(4, 32, 3, 3)
    x1 = jax.random.normal(next(keys), (2, 4, 16, 16), jnp.float32)
    fwd1 = jax.jit(functools.partial(downsample_forward, stride=2))
    y1 = jax.block_until_ready(fwd1(p1, x1))
    r1 = downsample_reference(p1, x1, stride=2)
    assert y1.shape == (2, 32, 8, 8)
    assert np.allclose(np.asarray(y1), r1, atol=1e-4, rtol=1e-4)

    # ---- config 2: multi-tile path with lane-dense (128-wide) tiles
    p2 = init_downsample(3, 16, 3, 3)
    x2 = jax.random.normal(next(keys), (2, 3, 32, 32), jnp.float32)
    fwd2 = jax.jit(functools.partial(downsample_forward, stride=(2, 2), tile_m=128))
    y2 = jax.block_until_ready(fwd2(p2, x2))
    r2 = downsample_reference(p2, x2, stride=(2, 2))
    assert y2.shape == (2, 16, 16, 16)
    assert np.allclose(np.asarray(y2), r2, atol=1e-4, rtol=1e-4)

    # ---- config 3: ragged last tile (M = 225 with tm = 128) exercises the
    #      masked edge store + padded activation path
    p3 = init_downsample(3, 24, 3, 3)
    x3 = jax.random.normal(next(keys), (2, 3, 30, 30), jnp.float32)
    fwd3 = jax.jit(functools.partial(downsample_forward, stride=2, tile_m=128))
    y3 = jax.block_until_ready(fwd3(p3, x3))
    r3 = downsample_reference(p3, x3, stride=2)
    assert y3.shape == (2, 24, 15, 15)
    assert np.allclose(np.asarray(y3), r3, atol=1e-4, rtol=1e-4)

    for y in (y1, y2, y3):
        assert bool(jnp.all(jnp.isfinite(y)))

    print("KERNEL_OK")
</pallas_src>

<mosaic_0001>
module attributes {stable_mosaic.version = 11 : i64} {
  func.func @_conv_bn_matmul_kernel(%arg0: i32, %arg1: i32, %arg2: memref<1x36x64xf32, #tpu.memory_space<vmem>>, %arg3: memref<32x36xf32, #tpu.memory_space<vmem>>, %arg4: memref<32x1xf32, #tpu.memory_space<vmem>>, %arg5: memref<1x32x64xf32, #tpu.memory_space<vmem>>) attributes {dimension_semantics = [#tpu.dimension_semantics<parallel>, #tpu.dimension_semantics<parallel>], iteration_bounds = array<i64: 2, 1>, scalar_prefetch = 0 : i64, scratch_operands = 0 : i64, tpu.core_type = #tpu.core_type<tc>, window_params = [{transform_indices = @transform_0, window_bounds = array<i64: 1, 36, 64>}, {pipeline_mode = #tpu.pipeline_mode<synchronous>, transform_indices = @transform_1, window_bounds = array<i64: 32, 36>}, {pipeline_mode = #tpu.pipeline_mode<synchronous>, transform_indices = @transform_2, window_bounds = array<i64: 32, 1>}, {transform_indices = @transform_3, window_bounds = array<i64: 1, 32, 64>}]} {
    %c0 = arith.constant 0 : index
    %c0_0 = arith.constant 0 : index
    %0 = vector.load %arg3[%c0, %c0_0] : memref<32x36xf32, #tpu.memory_space<vmem>>, vector<32x36xf32>
    %c0_1 = arith.constant 0 : index
    %c0_2 = arith.constant 0 : index
    %c0_3 = arith.constant 0 : index
    %1 = vector.load %arg2[%c0_1, %c0_2, %c0_3] : memref<1x36x64xf32, #tpu.memory_space<vmem>>, vector<1x36x64xf32>
    %2 = vector.shape_cast %1 : vector<1x36x64xf32> to vector<36x64xf32>
    %cst = arith.constant dense<0.000000e+00> : vector<32x64xf32>
    %3 = tpu.matmul %0, %2, %cst {dimension_numbers = #tpu.dot_dimension_numbers<[1], [0], [0], [1], [0, 0, 1, 1], [], []>} : vector<32x36xf32>, vector<36x64xf32>, vector<32x64xf32> -> vector<32x64xf32>
    %c0_4 = arith.constant 0 : index
    %c0_5 = arith.constant 0 : index
    %4 = vector.load %arg4[%c0_4, %c0_5] : memref<32x1xf32, #tpu.memory_space<vmem>>, vector<32x1xf32>
    %5 = vector.broadcast %4 : vector<32x1xf32> to vector<32x64xf32>
    %6 = arith.addf %3, %5 : vector<32x64xf32>
    %c0_6 = arith.constant 0 : index
    %c0_7 = arith.constant 0 : index
    %c0_8 = arith.constant 0 : index
    %7 = vector.load %arg5[%c0_6, %c0_7, %c0_8] : memref<1x32x64xf32, #tpu.memory_space<vmem>>, vector<1x32x64xf32>
    %8 = vector.shape_cast %7 : vector<1x32x64xf32> to vector<32x64xf32>
    %9 = vector.shape_cast %6 : vector<32x64xf32> to vector<1x32x64xf32>
    tpu.vector_store %arg5[%c0_6, %c0_7, %c0_8], %9 {strides = array<i32>} : memref<1x32x64xf32, #tpu.memory_space<vmem>>, vector<1x32x64xf32>,
    return
  }
  func.func @transform_0(%arg0: i32, %arg1: i32) -> (i32, i32, i32) {
    %c0_i32 = arith.constant 0 : i32
    %c0_i32_0 = arith.constant 0 : i32
    return %arg0, %c0_i32, %arg1 : i32, i32, i32
  }
  func.func @transform_1(%arg0: i32, %arg1: i32) -> (i32, i32) {
    %c0_i32 = arith.constant 0 : i32
    %c0_i32_0 = arith.constant 0 : i32
    %c0_i32_1 = arith.constant 0 : i32
    return %c0_i32, %c0_i32_0 : i32, i32
  }
  func.func @transform_2(%arg0: i32, %arg1: i32) -> (i32, i32) {
    %c0_i32 = arith.constant 0 : i32
    %c0_i32_0 = arith.constant 0 : i32
    %c0_i32_1 = arith.constant 0 : i32
    return %c0_i32, %c0_i32_0 : i32, i32
  }
  func.func @transform_3(%arg0: i32, %arg1: i32) -> (i32, i32, i32) {
    %c0_i32 = arith.constant 0 : i32
    %c0_i32_0 = arith.constant 0 : i32
    return %arg0, %c0_i32, %arg1 : i32, i32, i32
  }
}

</mosaic_0001>

<llo_original>
// kernel: downsample_forward.1
$region0: #{downsample_forward.1}
  #allocation0 [shape = 'u32[]', space=smem, size = 0x4, offset = 0x4, fixed_abs, tag = 'smem constant byte address 0x4 - core index']
  #allocation1 [shape = 'u32[144,128]{1,0:T(1,128)}', space=vmem, size = 0x12000, scoped, tag = 'internal scratch']
  %s0 = inlined_call_operand.vmem [shape: f32[2,36,64], index: 0, kind: input, shape index: {}]
  %s1 = inlined_call_operand.vmem [shape: f32[32,36], index: 1, kind: input, shape index: {}]
  %s2 = inlined_call_operand.vmem [shape: f32[32,1], index: 2, kind: input, shape index: {}]
  %s3 = inlined_call_operand.vmem [shape: f32[2,32,64], index: 3, kind: output, shape index: {}]
  %s4 = sld [smem:[#allocation0]]
  $region45: #{downsample_forward.1} parent=0
    _
  %s6 = ssub.s32 1, %s4
  %s7 = scalar_select 0, %s6, %s4
  loop: start=0, step=1, limit=4
  $region2: #{downsample_forward.1} parent=0 // loop_pre_header
    _
  $region3: #{downsample_forward.1} parent=0 // loop_header
    %s9 = sphi 0, %s13
    %p10 = scmp.ge.s32.totalorder %s9, 4
    %s16 = sphi 0, %s28
    %s17 = sphi 0, %s24
    %s18 = sphi 0, %s16
    %s19 = sphi 0, %s17
    %s20 = sphi 0, %s18
    %s21 = sphi 0, %s19
    %s33 = sphi 0, %s35
    %s36 = sphi 0, %s33
    %s37 = sphi 0, %s36
    %s53 = sphi 0, %s37
    %s57 = sphi 0, %s57
    %s59 = sphi 0, %s57
    %s60 = sphi 0, %s59
    %s74 = sphi 0, %s60
    %s78 = sphi 0, %s78
    %s80 = sphi 0, %s78
    %s81 = sphi 0, %s80
    %s95 = sphi 0, %s81
    %s103 = sphi 0, %s105
    %s106 = sphi 0, %s103
    %s107 = sphi 0, %s106
    %s123 = sphi 0, %s107
  $region4: #{downsample_forward.1} parent=0 // loop_header_branch
    %12 = sbr.rel (%p10) target = $region8
  $region5: #{downsample_forward.1} parent=0 // loop_body
    %s14 = ssub.s32 %s9, 1
    %s15 = ssub.s32 %s9, 2
    %s22 = sadd.s32 1, %s17
    %p23 = scmp.ge.s32.totalorder %s22, 1
    %s24 = scalar_select %p23, 0, %s22
    %s25 = sadd.s32 1, %s16
    %s26 = scalar_select %p23, %s25, %s16
    %p27 = scmp.ge.s32.totalorder %s26, 2
    %s28 = scalar_select %p27, 0, %s26
    %s29 = ssub.s32 %s16, %s28
    %s30 = ssub.s32 %s17, %s24
    %s31 = sor.u32 %s29, %s30
    %p32 = scmp.eq.s32.totalorder %s31, 0
    %s34 = sadd.s32 %s33, 1
    %s35 = scalar_select %p32, %s33, %s34
    %p38 = pneg %p32
    %p39 = scmp.eq.s32.totalorder %s9, 1
    %p40 = por %p38, %p39
    %p41 = scmp.ne.s32.totalorder %s33, %s36
    %p42 = scmp.eq.s32.totalorder %s9, 0
    %p43 = por %p41, %p42
    %p44 = scmp.ne.s32.totalorder %s33, %s36
    %p45 = scmp.eq.s32.totalorder %s14, 1
    %p46 = por %p44, %p45
    %p47 = scmp.ne.s32.totalorder %s36, %s37
    %p48 = scmp.eq.s32.totalorder %s14, 0
    %p49 = por %p47, %p48
    %p50 = scmp.ne.s32.totalorder %s36, %s37
    %p51 = scmp.eq.s32.totalorder %s15, 1
    %p52 = por %p50, %p51
    %p54 = scmp.ne.s32.totalorder %s37, %s53
    %p55 = scmp.eq.s32.totalorder %s15, 0
    %p56 = por %p54, %p55
    %s58 = sadd.s32 %s57, 1
    %p61 = scmp.eq.s32.totalorder %s9, 1
    %p62 = scmp.ne.s32.totalorder %s57, %s59
    %p63 = scmp.eq.s32.totalorder %s9, 0
    %p64 = por %p62, %p63
    %p65 = scmp.ne.s32.totalorder %s57, %s59
    %p66 = scmp.eq.s32.totalorder %s14, 1
    %p67 = por %p65, %p66
    %p68 = scmp.ne.s32.totalorder %s59, %s60
    %p69 = scmp.eq.s32.totalorder %s14, 0
    %p70 = por %p68, %p69
    %p71 = scmp.ne.s32.totalorder %s59, %s60
    %p72 = scmp.eq.s32.totalorder %s15, 1
    %p73 = por %p71, %p72
    %p75 = scmp.ne.s32.totalorder %s60, %s74
    %p76 = scmp.eq.s32.totalorder %s15, 0
    %p77 = por %p75, %p76
    %s79 = sadd.s32 %s78, 1
    %p82 = scmp.eq.s32.totalorder %s9, 1
    %p83 = scmp.ne.s32.totalorder %s78, %s80
    %p84 = scmp.eq.s32.totalorder %s9, 0
    %p85 = por %p83, %p84
    %p86 = scmp.ne.s32.totalorder %s78, %s80
    %p87 = scmp.eq.s32.totalorder %s14, 1
    %p88 = por %p86, %p87
    %p89 = scmp.ne.s32.totalorder %s80, %s81
    %p90 = scmp.eq.s32.totalorder %s14, 0
    %p91 = por %p89, %p90
    %p92 = scmp.ne.s32.totalorder %s80, %s81
    %p93 = scmp.eq.s32.totalorder %s15, 1
    %p94 = por %p92, %p93
    %p96 = scmp.ne.s32.totalorder %s81, %s95
    %p97 = scmp.eq.s32.totalorder %s15, 0
    %p98 = por %p96, %p97
    %s99 = ssub.s32 %s16, %s28
    %s100 = ssub.s32 %s17, %s24
    %s101 = sor.u32 %s99, %s100
    %p102 = scmp.eq.s32.totalorder %s101, 0
    %s104 = sadd.s32 %s103, 1
    %s105 = scalar_select %p102, %s103, %s104
    %p108 = pneg %p102
    %p109 = scmp.eq.s32.totalorder %s9, 1
    %p110 = por %p108, %p109
    %p111 = scmp.ne.s32.totalorder %s103, %s106
    %p112 = scmp.eq.s32.totalorder %s9, 0
    %p113 = por %p111, %p112
    %p114 = scmp.ne.s32.totalorder %s103, %s106
    %p115 = scmp.eq.s32.totalorder %s14, 1
    %p116 = por %p114, %p115
    %p117 = scmp.ne.s32.totalorder %s106, %s107
    %p118 = scmp.eq.s32.totalorder %s14, 0
    %p119 = por %p117, %p118
    %p120 = scmp.ne.s32.totalorder %s106, %s107
    %p121 = scmp.eq.s32.totalorder %s15, 1
    %p122 = por %p120, %p121
    %p124 = scmp.ne.s32.totalorder %s107, %s123
    %p125 = scmp.eq.s32.totalorder %s15, 0
    %p126 = por %p124, %p125
    %p127 = scmp.le.s32.totalorder 1, %s9
    %p128 = scmp.lt.s32.totalorder %s9, 3
    %p129 = pnand %p127, %p128
    %p130 = pneg %p129
    // Predicated region
    $region9: #{downsample_forward.1} parent=5 // pred_check
      _
    $region10: #{downsample_forward.1} parent=5 // pred_check_branch
      %132 = sbr.rel (%p129) target = $region12
    $region11: #{downsample_forward.1} parent=5 // pred_region
      %s133 = ssub.s32 %s9, 1
      // Predicated region
      $region13: #{downsample_forward.1} parent=11 // pred_check
        %p134 = pneg %p70
      $region14: #{downsample_forward.1} parent=11 // pred_check_branch
        %136 = sbr.rel (%p134) target = $region16
      $region15: #{downsample_forward.1} parent=11 // pred_region
        _
      $region16: #{downsample_forward.1} parent=11 // pred_fallthru
        _
      // Predicated region
      $region17: #{downsample_forward.1} parent=11 // pred_check
        %p137 = pneg %p91
      $region18: #{downsample_forward.1} parent=11 // pred_check_branch
        %139 = sbr.rel (%p137) target = $region20
      $region19: #{downsample_forward.1} parent=11 // pred_region
        _
      $region20: #{downsample_forward.1} parent=11 // pred_fallthru
        _
    $region12: #{downsample_forward.1} parent=5 // pred_fallthru
      _
    %p140 = scmp.lt.s32.totalorder %s9, 2
    // Predicated region
    $region21: #{downsample_forward.1} parent=5 // pred_check
      %p141 = pneg %p140
    $region22: #{downsample_forward.1} parent=5 // pred_check_branch
      %143 = sbr.rel (%p141) target = $region24
    $region23: #{downsample_forward.1} parent=5 // pred_region
      // Predicated region
      $region25: #{downsample_forward.1} parent=23 // pred_check
        %p144 = pneg %p43
      $region26: #{downsample_forward.1} parent=23 // pred_check_branch
        %146 = sbr.rel (%p144) target = $region28
      $region27: #{downsample_forward.1} parent=23 // pred_region
        %p147 = scmp.lt.s32.totalorder %s16, 1
        %s148 = scalar_select %p147, %s16, 1
        %p149 = scmp.lt.s32.totalorder %s17, 0
        %s150 = scalar_select %p149, %s17, 0
        %s151 = smul.addr %s148, 5
        %s152 = sadd.s32 %s150, %s151
        %s153 = smul.addr %s152, 8
        %s154 = scalar_lea.vmem %s0, %s153
      $region28: #{downsample_forward.1} parent=23 // pred_fallthru
        _
    $region24: #{downsample_forward.1} parent=5 // pred_fallthru
      _
    %p155 = scmp.le.s32.totalorder 1, %s9
    %p156 = scmp.lt.s32.totalorder %s9, 3
    %p157 = pnand %p155, %p156
    %p158 = pneg %p157
    // Predicated region
    $region29: #{downsample_forward.1} parent=5 // pred_check
      _
    $region30: #{downsample_forward.1} parent=5 // pred_check_branch
      %160 = sbr.rel (%p157) target = $region32
    $region31: #{downsample_forward.1} parent=5 // pred_region
      %s161 = ssub.s32 %s9, 1
      %p162 = scmp.lt.s32.totalorder %s18, 1
      %s163 = scalar_select %p162, %s18, 1
      %p164 = scmp.lt.s32.totalorder %s19, 0
      %s165 = scalar_select %p164, %s19, 0
      %s166 = smul.addr %s163, 5
      %s167 = sadd.s32 %s165, %s166
      %s168 = smul.addr %s167, 8
      %s169 = scalar_lea.vmem %s0, %s168
      %p170 = pneg %p49
      %p171 = pneg %p46
      %p172 = pneg %p70
      %p173 = pneg %p67
      %p174 = pneg %p91
      %p175 = pneg %p88
      %p176 = pneg %p119
      %p177 = pneg %p116
      %p178 = scmp.lt.s32.totalorder %s18, 1
      %s179 = scalar_select %p178, %s18, 1
      %p180 = scmp.lt.s32.totalorder %s19, 0
      %s181 = scalar_select %p180, %s19, 0
      %s182 = smul.addr %s179, 4
      %s183 = sadd.s32 %s181, %s182
      %s184 = smul.addr %s183, 8
      %s185 = scalar_lea.vmem %s3, %s184
      %p186 = scmp.lt.s32.totalorder %s18, 1
      %s187 = scalar_select %p186, %s18, 1
      %p188 = scmp.lt.s32.totalorder %s19, 0
      %s189 = scalar_select %p188, %s19, 0
      %s190 = smul.addr %s187, 5
      %s191 = sadd.s32 %s189, %s190
      %s192 = smul.addr %s191, 8
      %s193 = scalar_lea.vmem %s0, %s192
      %p194 = scmp.lt.s32.totalorder %s18, 1
      %s195 = scalar_select %p194, %s18, 1
      %p196 = scmp.lt.s32.totalorder %s19, 0
      %s197 = scalar_select %p196, %s19, 0
      %s198 = smul.addr %s195, 4
      %s199 = sadd.s32 %s197, %s198
      %s200 = smul.addr %s199, 8
      %s201 = scalar_lea.vmem %s3, %s200
      %v202 = vld [vmem:[%s1] sm:$0xff]
      %v203 = vld [vmem:[%s1 + $0x8] sm:$0xff]
      %v204 = vld [vmem:[%s1 + $0x10] sm:$0xff]
      %v205 = vld [vmem:[%s1 + $0x18] sm:$0xff]
      %v206 = vld [vmem:[%s193] sm:$0xff]
      %v207 = vld [vmem:[%s193 + $0x8] sm:$0xff]
      %v208 = vld [vmem:[%s193 + $0x10] sm:$0xff]
      %v209 = vld [vmem:[%s193 + $0x18] sm:$0xff]
      %v210 = vld [vmem:[%s193 + $0x20] sm:$0xf]
      %v211 = vld [vmem:[%s2] sm:$0xff]
      %v212 = vld [vmem:[%s2 + $0x8] sm:$0xff]
      %v213 = vld [vmem:[%s2 + $0x10] sm:$0xff]
      %v214 = vld [vmem:[%s2 + $0x18] sm:$0xff]
      %216 = vset.pattern.permute.xlu0 0
      %217 = vperm.xlu0 %216, %v211
      %v218 = vpop.permute.xlu0 %217
      %221 = vset.pattern.permute.xlu0 0
      %222 = vperm.xlu0 %221, %v212
      %v223 = vpop.permute.xlu0 %222
      %226 = vset.pattern.permute.xlu0 0
      %227 = vperm.xlu0 %226, %v213
      %v228 = vpop.permute.xlu0 %227
      %231 = vset.pattern.permute.xlu0 0
      %232 = vperm.xlu0 %231, %v214
      %v233 = vpop.permute.xlu0 %232
      %vm235 = vcmask 293888
      %v237 = vsel %vm235, %v202, 0
      %v240 = vsel %vm235, %v203, 0
      %v243 = vsel %vm235, %v204, 0
      %v246 = vsel %vm235, %v205, 0
      %vm248 = vcmask 1043456
      %v250 = vsel %vm248, %v210, 0
      %252 = vmatprep.subr.mxu0 0.0
      %253 = vmatpush1.msra.mxu0 %v206
      %254 = vmatprep.subr.mxu0 0.0
      %255 = vmatpush1.msra.mxu0 %v207
      %256 = vmatprep.subr.mxu0 0.0
      %257 = vmatpush1.msra.mxu0 %v208
      %258 = vmatprep.subr.mxu0 0.0
      %259 = vmatpush1.msra.mxu0 %v209
      %260 = vmatprep.subr.mxu0 0.0
      %261 = vmatpush1.msra.mxu0 %v250
      %262 = vmatprep.subr.mxu0 0.0
      %263 = vmatpush1.msra.mxu0 0.0
      %264 = vmatprep.subr.mxu0 0.0
      %265 = vmatpush1.msra.mxu0 0.0
      %266 = vmatprep.subr.mxu0 0.0
      %267 = vmatpush1.msra.mxu0 0.0
      %268 = vmatprep.subr.mxu0 0.0
      %269 = vmatpush1.msra.mxu0 0.0
      %270 = vmatprep.subr.mxu0 0.0
      %271 = vmatpush1.msra.mxu0 0.0
      %272 = vmatprep.subr.mxu0 0.0
      %273 = vmatpush1.msra.mxu0 0.0
      %274 = vmatprep.subr.mxu0 0.0
      %275 = vmatpush1.msra.mxu0 0.0
      %276 = vmatprep.subr.mxu0 0.0
      %277 = vmatpush1.msra.mxu0 0.0
      %278 = vmatprep.subr.mxu0 0.0
      %279 = vmatpush1.msra.mxu0 0.0
      %280 = vmatprep.subr.mxu0 0.0
      %281 = vmatpush1.msra.mxu0 0.0
      %282 = vmatprep.subr.mxu0 0.0
      %283 = vmatpush1.msra.mxu0 0.0
      %284 = vmatprep.subr.mxu0 0.0
      %285 = vmatpush1.msra.mxu0 0.0
      %286 = vmatprep.subr.mxu0 0.0
      %287 = vmatpush1.msra.mxu0 0.0
      %288 = vmatprep.subr.mxu0 0.0
      %289 = vmatpush1.msra.mxu0 0.0
      %290 = vmatprep.subr.mxu0 0.0
      %291 = vmatpush1.msra.mxu0 0.0
      %292 = vmatprep.subr.mxu0 0.0
      %293 = vmatpush1.msra.mxu0 0.0
      %294 = vmatprep.subr.mxu0 0.0
      %295 = vmatpush1.msra.mxu0 0.0
      %296 = vmatprep.subr.mxu0 0.0
      %297 = vmatpush1.msra.mxu0 0.0
      %298 = vmatprep.subr.mxu0 0.0
      %299 = vmatpush1.msra.mxu0 0.0
      %300 = vmatprep.subr.mxu0 0.0
      %301 = vmatpush1.msra.mxu0 0.0
      %302 = vmatprep.subr.mxu0 0.0
      %303 = vmatpush1.msra.mxu0 0.0
      %304 = vmatprep.subr.mxu0 0.0
      %305 = vmatpush1.msra.mxu0 0.0
      %306 = vmatprep.subr.mxu0 0.0
      %307 = vmatpush1.msra.mxu0 0.0
      %308 = vmatprep.subr.mxu0 0.0
      %309 = vmatpush1.msra.mxu0 0.0
      %310 = vmatprep.subr.mxu0 0.0
      %311 = vmatpush1.msra.mxu0 0.0
      %312 = vmatprep.subr.mxu0 0.0
      %313 = vmatpush1.msra.mxu0 0.0
      %314 = vmatprep.subr.mxu0 0.0
      %315 = vmatpush1.msra.mxu0 0.0
      %316 = vmatprep.mubr.f32.mxu0 0.0
      %317 = vmatmul.mubr.f32.gmra.mrb[0].mxu0 %v237
      %v318 = vpop.f32.mrb[0].mxu0
      %v319 = vadd.f32 %v218, %v318
      %v320 = vpop.f32.mrb[0].mxu0
      %321 = vmatprep.mubr.f32.mxu0 0.0
      %322 = vmatmul.mubr.f32.gmra.mrb[0].mxu0 %v240
      %v323 = vpop.f32.mrb[0].mxu0
      %v324 = vadd.f32 %v223, %v323
      %v325 = vpop.f32.mrb[0].mxu0
      %326 = vmatprep.mubr.f32.mxu0 0.0
      %327 = vmatmul.mubr.f32.gmra.mrb[0].mxu0 %v243
      %v328 = vpop.f32.mrb[0].mxu0
      %v329 = vadd.f32 %v228, %v328
      %v330 = vpop.f32.mrb[0].mxu0
      %331 = vmatprep.mubr.f32.mxu0 0.0
      %332 = vmatmul.mubr.f32.gmra.mrb[0].mxu0 %v246
      %v333 = vpop.f32.mrb[0].mxu0
      %v334 = vadd.f32 %v233, %v333
      %v335 = vpop.f32.mrb[0].mxu0
      %336 = vdwg.mxu0
      %vm337 = vcmask 523264
      %338 = vst.msk [vmem:[%s201] sm:$0xff] %vm337, %v319
      %339 = vst.msk [vmem:[%s201 + $0x8] sm:$0xff] %vm337, %v324
      %340 = vst.msk [vmem:[%s201 + $0x10] sm:$0xff] %vm337, %v329
      %341 = vst.msk [vmem:[%s201 + $0x18] sm:$0xff] %vm337, %v334
      %p342 = scmp.lt.s32.totalorder %s18, 1
      %s343 = scalar_select %p342, %s18, 1
      %p344 = scmp.lt.s32.totalorder %s19, 0
      %s345 = scalar_select %p344, %s19, 0
      %s346 = smul.addr %s343, 4
      %s347 = sadd.s32 %s345, %s346
      %s348 = smul.addr %s347, 8
      %s349 = scalar_lea.vmem %s3, %s348
      // Predicated region
      $region33: #{downsample_forward.1} parent=31 // pred_check
        %p350 = pneg %p116
      $region34: #{downsample_forward.1} parent=31 // pred_check_branch
        %352 = sbr.rel (%p350) target = $region36
      $region35: #{downsample_forward.1} parent=31 // pred_region
        _
      $region36: #{downsample_forward.1} parent=31 // pred_fallthru
        _
    $region32: #{downsample_forward.1} parent=5 // pred_fallthru
      _
    %p353 = scmp.le.s32.totalorder 2, %s9
    // Predicated region
    $region37: #{downsample_forward.1} parent=5 // pred_check
      %p354 = pneg %p353
    $region38: #{downsample_forward.1} parent=5 // pred_check_branch
      %356 = sbr.rel (%p354) target = $region40
    $region39: #{downsample_forward.1} parent=5 // pred_region
      %s357 = ssub.s32 %s9, 2
      // Predicated region
      $region41: #{downsample_forward.1} parent=39 // pred_check
        %p358 = pneg %p122
      $region42: #{downsample_forward.1} parent=39 // pred_check_branch
        %360 = sbr.rel (%p358) target = $region44
      $region43: #{downsample_forward.1} parent=39 // pred_region
        %p361 = scmp.lt.s32.totalorder %s20, 1
        %s362 = scalar_select %p361, %s20, 1
        %p363 = scmp.lt.s32.totalorder %s21, 0
        %s364 = scalar_select %p363, %s21, 0
        %s365 = smul.addr %s362, 4
        %s366 = sadd.s32 %s364, %s365
        %s367 = smul.addr %s366, 8
        %s368 = scalar_lea.vmem %s3, %s367
      $region44: #{downsample_forward.1} parent=39 // pred_fallthru
        _
    $region40: #{downsample_forward.1} parent=5 // pred_fallthru
      _
  $region6: #{downsample_forward.1} parent=0 // loop_footer
    %s13 = sadd.s32 1, %s9
  $region7: #{downsample_forward.1} parent=0 // loop_footer_branch
    %8 = sbr.rel target = $region3
  $region8: #{downsample_forward.1} parent=0 // loop_exit
    _

</llo_original>
